<compile_context>
chip_gen: v5e
topology: v5e:2x2
jax: 0.10.0
libtpu: 0.0.40
codegen_flags: <defaults>
</compile_context>

<pallas_src>
import jax
import jax.numpy as jnp
from jax import lax
from jax.experimental import pallas as pl
from jax.experimental.pallas import tpu as pltpu

# ---- model hyperparameters (consistent with X.view(-1, 300)) ----
N_CLASS = 16          # vocabulary size
N_STEP = 3            # context length
EMBEDDING_SIZE = 100  # n_step * embedding_size == 300
N_HIDDEN = 32
IN_FEATS = N_STEP * EMBEDDING_SIZE  # 300
N_FUSED = N_HIDDEN + 1              # fused [hidden | x@W] width


def _round_up(x, m):
    return (x + m - 1) // m * m


def nnlm_kernel(idx_ref, c_ref, hw_ref, d_ref, u_ref, b_ref, o_ref):
    # idx_ref: (TM, 3) int32 token indices        (tiled over batch)
    # c_ref:   (16, 100) bf16 embedding table     (resident)
    # hw_ref:  (3, 100, 33) bf16 fused [H | W]    (resident, per-step slabs)
    # d_ref:   (1, 32) f32,  u_ref: (1, 32) f32,  b_ref: (1, 1) f32
    # o_ref:   (TM, 1) f32
    tm = idx_ref.shape[0]
    idx = idx_ref[...]                                           # (tm, 3) int32
    c = c_ref[...]                                               # (16, 100) bf16
    class_iota = lax.broadcasted_iota(jnp.int32, (tm, N_CLASS), 1)

    # acc = [x @ H | x @ W], accumulated over the context steps in f32.
    acc = jnp.zeros((tm, N_FUSED), jnp.float32)
    for s in range(N_STEP):                                      # static, unrolled (3)
        onehot = (idx[:, s:s + 1] == class_iota).astype(jnp.bfloat16)    # (tm, 16)
        # Gather-as-matmul: selects exact bf16 rows of C.
        emb = jnp.dot(onehot, c, preferred_element_type=jnp.float32)     # (tm, 100)
        acc = acc + jnp.dot(emb.astype(jnp.bfloat16), hw_ref[s],
                            preferred_element_type=jnp.float32)          # (tm, 33)

    hidden = acc[:, :N_HIDDEN]                 # slices stay within one 128-lane tile
    xw = acc[:, N_HIDDEN:N_FUSED]              # (tm, 1)

    t = jnp.tanh(d_ref[...] + hidden)                            # f32 (v5e-safe)
    tu = jnp.sum(t * u_ref[...], axis=-1, keepdims=True)         # VPU mul + XLU reduce
    o_ref[...] = (b_ref[...] + xw + tu).astype(o_ref.dtype)


def simple_forward(X_idx, C, H_t, d, U_t, W_t, b, *, tm=256):
    """Pallas-backed forward pass of `Simple`.

    X_idx: (B, n_step) int token indices.  Weights stored transposed vs PyTorch:
      H_t (300, n_hidden), W_t (300, 1), U_t (n_hidden, 1).
    Returns: (B, 1) float32.
    """
    B = X_idx.shape[0]

    # Fused [H | W] weight -> (300, 33), then split per context step -> (3, 100, 33).
    hw = jnp.concatenate([H_t, W_t], axis=1).astype(jnp.bfloat16)
    hw = hw.reshape(N_STEP, EMBEDDING_SIZE, N_FUSED)
    c_bf16 = C.astype(jnp.bfloat16)
    d2 = d.reshape(1, N_HIDDEN).astype(jnp.float32)
    u2 = U_t.reshape(1, N_HIDDEN).astype(jnp.float32)
    b2 = b.reshape(1, 1).astype(jnp.float32)

    # Batch tiling: shrink the tile for tiny batches, pad B to a tile multiple.
    tm = min(tm, _round_up(B, 8))
    b_pad = _round_up(B, tm)
    idx = X_idx.astype(jnp.int32)
    if b_pad != B:
        idx = jnp.pad(idx, ((0, b_pad - B), (0, 0)))   # pads gather row 0 (harmless)
    grid = (b_pad // tm,)

    out = pl.pallas_call(
        nnlm_kernel,
        out_shape=jax.ShapeDtypeStruct((b_pad, 1), jnp.float32),
        grid=grid,
        in_specs=[
            pl.BlockSpec((tm, N_STEP), lambda i: (i, 0)),                     # indices
            pl.BlockSpec((N_CLASS, EMBEDDING_SIZE), lambda i: (0, 0)),        # C
            pl.BlockSpec((N_STEP, EMBEDDING_SIZE, N_FUSED),
                         lambda i: (0, 0, 0)),                                # [H|W]
            pl.BlockSpec((1, N_HIDDEN), lambda i: (0, 0)),                    # d
            pl.BlockSpec((1, N_HIDDEN), lambda i: (0, 0)),                    # U row
            pl.BlockSpec((1, 1), lambda i: (0, 0)),                           # b
        ],
        out_specs=pl.BlockSpec((tm, 1), lambda i: (i, 0)),
        compiler_params=pltpu.CompilerParams(
            dimension_semantics=("parallel",)),                 # v7x: 2 TCs can split
    )(idx, c_bf16, hw, d2, u2, b2)
    return out[:B]


def simple_forward_ref(X_idx, C, H_t, d, U_t, W_t, b):
    """Pure-JAX f32 reference mirroring the PyTorch forward."""
    B = X_idx.shape[0]
    x = jnp.take(C, X_idx, axis=0).reshape(B, IN_FEATS)
    t = jnp.tanh(d.reshape(1, -1) + x @ H_t)
    return b.reshape(1, 1) + x @ W_t + t @ U_t


def init_params(key):
    """Deterministic parameter init matching PyTorch default schemes."""
    k_c, k_h, k_u, k_w = jax.random.split(key, 4)
    # nn.Embedding: N(0, 1)
    C = jax.random.normal(k_c, (N_CLASS, EMBEDDING_SIZE), jnp.float32)
    # nn.Linear(in, out, bias=False): U(-1/sqrt(in), 1/sqrt(in)); stored transposed.
    lim_h = 1.0 / jnp.sqrt(jnp.float32(IN_FEATS))
    H_t = jax.random.uniform(k_h, (IN_FEATS, N_HIDDEN), jnp.float32,
                             minval=-lim_h, maxval=lim_h)
    lim_u = 1.0 / jnp.sqrt(jnp.float32(N_HIDDEN))
    U_t = jax.random.uniform(k_u, (N_HIDDEN, 1), jnp.float32,
                             minval=-lim_u, maxval=lim_u)
    lim_w = 1.0 / jnp.sqrt(jnp.float32(IN_FEATS))
    W_t = jax.random.uniform(k_w, (IN_FEATS, 1), jnp.float32,
                             minval=-lim_w, maxval=lim_w)
    # nn.Parameter(torch.ones(...))
    d = jnp.ones((N_HIDDEN,), jnp.float32)
    b = jnp.ones((1,), jnp.float32)
    return C, H_t, d, U_t, W_t, b


if __name__ == "__main__":
    key = jax.random.PRNGKey(0)
    k_params, k_idx = jax.random.split(key)

    C, H_t, d, U_t, W_t, b = init_params(k_params)

    batch = 2
    X_idx = jax.random.randint(k_idx, (batch, N_STEP), 0, N_CLASS, jnp.int32)

    out = simple_forward(X_idx, C, H_t, d, U_t, W_t, b)
    out = jax.block_until_ready(out)

    ref = simple_forward_ref(X_idx, C, H_t, d, U_t, W_t, b)
    assert out.shape == (batch, 1)
    # bf16 MXU inputs (f32 accumulation / elementwise) -> bf16-level tolerance vs
    # the pure-f32 reference.
    assert jnp.allclose(out, ref, atol=2e-2, rtol=2e-2), (out, ref)

    print("KERNEL_OK")
</pallas_src>

<mosaic_0001>
module attributes {stable_mosaic.version = 11 : i64} {
  func.func @nnlm_kernel(%arg0: i32, %arg1: memref<8x3xi32, #tpu.memory_space<vmem>>, %arg2: memref<16x100xbf16, #tpu.memory_space<vmem>>, %arg3: memref<3x100x33xbf16, #tpu.memory_space<vmem>>, %arg4: memref<1x32xf32, #tpu.memory_space<vmem>>, %arg5: memref<1x32xf32, #tpu.memory_space<vmem>>, %arg6: memref<1x1xf32, #tpu.memory_space<vmem>>, %arg7: memref<8x1xf32, #tpu.memory_space<vmem>>) attributes {dimension_semantics = [#tpu.dimension_semantics<parallel>], iteration_bounds = array<i64: 1>, scalar_prefetch = 0 : i64, scratch_operands = 0 : i64, tpu.core_type = #tpu.core_type<tc>, window_params = [{transform_indices = @transform_0, window_bounds = array<i64: 8, 3>}, {pipeline_mode = #tpu.pipeline_mode<synchronous>, transform_indices = @transform_1, window_bounds = array<i64: 16, 100>}, {pipeline_mode = #tpu.pipeline_mode<synchronous>, transform_indices = @transform_2, window_bounds = array<i64: 3, 100, 33>}, {pipeline_mode = #tpu.pipeline_mode<synchronous>, transform_indices = @transform_3, window_bounds = array<i64: 1, 32>}, {pipeline_mode = #tpu.pipeline_mode<synchronous>, transform_indices = @transform_4, window_bounds = array<i64: 1, 32>}, {pipeline_mode = #tpu.pipeline_mode<synchronous>, transform_indices = @transform_5, window_bounds = array<i64: 1, 1>}, {transform_indices = @transform_6, window_bounds = array<i64: 8, 1>}]} {
    %c0 = arith.constant 0 : index
    %c0_0 = arith.constant 0 : index
    %0 = vector.load %arg1[%c0, %c0_0] : memref<8x3xi32, #tpu.memory_space<vmem>>, vector<8x3xi32>
    %c0_1 = arith.constant 0 : index
    %c0_2 = arith.constant 0 : index
    %1 = vector.load %arg2[%c0_1, %c0_2] : memref<16x100xbf16, #tpu.memory_space<vmem>>, vector<16x100xbf16>
    %2 = tpu.iota {dimensions = array<i32: 1>} : vector<8x16xi32>
    %cst = arith.constant 0.000000e+00 : f32
    %3 = vector.broadcast %cst : f32 to vector<8x33xf32>
    %4 = vector.extract_strided_slice %0 {offsets = [0, 0], sizes = [8, 1], strides = [1, 1]} : vector<8x3xi32> to vector<8x1xi32>
    %5 = vector.broadcast %4 : vector<8x1xi32> to vector<8x16xi32>
    %6 = arith.cmpi eq, %5, %2 : vector<8x16xi32>
    %7 = arith.extui %6 : vector<8x16xi1> to vector<8x16xi32>
    %8 = arith.sitofp %7 : vector<8x16xi32> to vector<8x16xf32>
    %9 = arith.truncf %8 : vector<8x16xf32> to vector<8x16xbf16>
    %cst_3 = arith.constant dense<0.000000e+00> : vector<8x100xf32>
    %10 = tpu.matmul %9, %1, %cst_3 {dimension_numbers = #tpu.dot_dimension_numbers<[1], [0], [0], [1], [0, 0, 1, 1], [], []>} : vector<8x16xbf16>, vector<16x100xbf16>, vector<8x100xf32> -> vector<8x100xf32>
    %11 = arith.truncf %10 : vector<8x100xf32> to vector<8x100xbf16>
    %c0_4 = arith.constant 0 : index
    %c0_5 = arith.constant 0 : index
    %c0_6 = arith.constant 0 : index
    %12 = vector.load %arg3[%c0_4, %c0_5, %c0_6] : memref<3x100x33xbf16, #tpu.memory_space<vmem>>, vector<1x100x33xbf16>
    %13 = vector.shape_cast %12 : vector<1x100x33xbf16> to vector<100x33xbf16>
    %cst_7 = arith.constant dense<0.000000e+00> : vector<8x33xf32>
    %14 = tpu.matmul %11, %13, %cst_7 {dimension_numbers = #tpu.dot_dimension_numbers<[1], [0], [0], [1], [0, 0, 1, 1], [], []>} : vector<8x100xbf16>, vector<100x33xbf16>, vector<8x33xf32> -> vector<8x33xf32>
    %15 = arith.addf %3, %14 : vector<8x33xf32>
    %16 = vector.extract_strided_slice %0 {offsets = [0, 1], sizes = [8, 1], strides = [1, 1]} : vector<8x3xi32> to vector<8x1xi32>
    %17 = vector.broadcast %16 : vector<8x1xi32> to vector<8x16xi32>
    %18 = arith.cmpi eq, %17, %2 : vector<8x16xi32>
    %19 = arith.extui %18 : vector<8x16xi1> to vector<8x16xi32>
    %20 = arith.sitofp %19 : vector<8x16xi32> to vector<8x16xf32>
    %21 = arith.truncf %20 : vector<8x16xf32> to vector<8x16xbf16>
    %cst_8 = arith.constant dense<0.000000e+00> : vector<8x100xf32>
    %22 = tpu.matmul %21, %1, %cst_8 {dimension_numbers = #tpu.dot_dimension_numbers<[1], [0], [0], [1], [0, 0, 1, 1], [], []>} : vector<8x16xbf16>, vector<16x100xbf16>, vector<8x100xf32> -> vector<8x100xf32>
    %23 = arith.truncf %22 : vector<8x100xf32> to vector<8x100xbf16>
    %c1 = arith.constant 1 : index
    %c0_9 = arith.constant 0 : index
    %c0_10 = arith.constant 0 : index
    %24 = vector.load %arg3[%c1, %c0_9, %c0_10] : memref<3x100x33xbf16, #tpu.memory_space<vmem>>, vector<1x100x33xbf16>
    %25 = vector.shape_cast %24 : vector<1x100x33xbf16> to vector<100x33xbf16>
    %cst_11 = arith.constant dense<0.000000e+00> : vector<8x33xf32>
    %26 = tpu.matmul %23, %25, %cst_11 {dimension_numbers = #tpu.dot_dimension_numbers<[1], [0], [0], [1], [0, 0, 1, 1], [], []>} : vector<8x100xbf16>, vector<100x33xbf16>, vector<8x33xf32> -> vector<8x33xf32>
    %27 = arith.addf %15, %26 : vector<8x33xf32>
    %28 = vector.extract_strided_slice %0 {offsets = [0, 2], sizes = [8, 1], strides = [1, 1]} : vector<8x3xi32> to vector<8x1xi32>
    %29 = vector.broadcast %28 : vector<8x1xi32> to vector<8x16xi32>
    %30 = arith.cmpi eq, %29, %2 : vector<8x16xi32>
    %31 = arith.extui %30 : vector<8x16xi1> to vector<8x16xi32>
    %32 = arith.sitofp %31 : vector<8x16xi32> to vector<8x16xf32>
    %33 = arith.truncf %32 : vector<8x16xf32> to vector<8x16xbf16>
    %cst_12 = arith.constant dense<0.000000e+00> : vector<8x100xf32>
    %34 = tpu.matmul %33, %1, %cst_12 {dimension_numbers = #tpu.dot_dimension_numbers<[1], [0], [0], [1], [0, 0, 1, 1], [], []>} : vector<8x16xbf16>, vector<16x100xbf16>, vector<8x100xf32> -> vector<8x100xf32>
    %35 = arith.truncf %34 : vector<8x100xf32> to vector<8x100xbf16>
    %c2 = arith.constant 2 : index
    %c0_13 = arith.constant 0 : index
    %c0_14 = arith.constant 0 : index
    %36 = vector.load %arg3[%c2, %c0_13, %c0_14] : memref<3x100x33xbf16, #tpu.memory_space<vmem>>, vector<1x100x33xbf16>
    %37 = vector.shape_cast %36 : vector<1x100x33xbf16> to vector<100x33xbf16>
    %cst_15 = arith.constant dense<0.000000e+00> : vector<8x33xf32>
    %38 = tpu.matmul %35, %37, %cst_15 {dimension_numbers = #tpu.dot_dimension_numbers<[1], [0], [0], [1], [0, 0, 1, 1], [], []>} : vector<8x100xbf16>, vector<100x33xbf16>, vector<8x33xf32> -> vector<8x33xf32>
    %39 = arith.addf %27, %38 : vector<8x33xf32>
    %40 = vector.extract_strided_slice %39 {offsets = [0, 0], sizes = [8, 32], strides = [1, 1]} : vector<8x33xf32> to vector<8x32xf32>
    %41 = vector.extract_strided_slice %39 {offsets = [0, 32], sizes = [8, 1], strides = [1, 1]} : vector<8x33xf32> to vector<8x1xf32>
    %c0_16 = arith.constant 0 : index
    %c0_17 = arith.constant 0 : index
    %42 = vector.load %arg4[%c0_16, %c0_17] : memref<1x32xf32, #tpu.memory_space<vmem>>, vector<1x32xf32>
    %43 = vector.broadcast %42 : vector<1x32xf32> to vector<8x32xf32>
    %44 = arith.addf %43, %40 : vector<8x32xf32>
    %45 = math.tanh %44 : vector<8x32xf32>
    %c0_18 = arith.constant 0 : index
    %c0_19 = arith.constant 0 : index
    %46 = vector.load %arg5[%c0_18, %c0_19] : memref<1x32xf32, #tpu.memory_space<vmem>>, vector<1x32xf32>
    %47 = vector.broadcast %46 : vector<1x32xf32> to vector<8x32xf32>
    %48 = arith.mulf %45, %47 : vector<8x32xf32>
    %cst_20 = arith.constant dense<0.000000e+00> : vector<8xf32>
    %49 = vector.multi_reduction <add>, %48, %cst_20 [1] : vector<8x32xf32> to vector<8xf32>
    %50 = vector.shape_cast %49 : vector<8xf32> to vector<8x1xf32>
    %c0_21 = arith.constant 0 : index
    %c0_22 = arith.constant 0 : index
    %51 = vector.load %arg6[%c0_21, %c0_22] : memref<1x1xf32, #tpu.memory_space<vmem>>, vector<1x1xf32>
    %52 = vector.broadcast %51 : vector<1x1xf32> to vector<8x1xf32>
    %53 = arith.addf %52, %41 : vector<8x1xf32>
    %54 = arith.addf %53, %50 : vector<8x1xf32>
    %c0_23 = arith.constant 0 : index
    %c0_24 = arith.constant 0 : index
    %55 = vector.load %arg7[%c0_23, %c0_24] : memref<8x1xf32, #tpu.memory_space<vmem>>, vector<8x1xf32>
    tpu.vector_store %arg7[%c0_23, %c0_24], %54 {strides = array<i32>} : memref<8x1xf32, #tpu.memory_space<vmem>>, vector<8x1xf32>,
    return
  }
  func.func @transform_0(%arg0: i32) -> (i32, i32) {
    %c0_i32 = arith.constant 0 : i32
    %c0_i32_0 = arith.constant 0 : i32
    return %arg0, %c0_i32 : i32, i32
  }
  func.func @transform_1(%arg0: i32) -> (i32, i32) {
    %c0_i32 = arith.constant 0 : i32
    %c0_i32_0 = arith.constant 0 : i32
    %c0_i32_1 = arith.constant 0 : i32
    return %c0_i32, %c0_i32_0 : i32, i32
  }
  func.func @transform_2(%arg0: i32) -> (i32, i32, i32) {
    %c0_i32 = arith.constant 0 : i32
    %c0_i32_0 = arith.constant 0 : i32
    %c0_i32_1 = arith.constant 0 : i32
    %c0_i32_2 = arith.constant 0 : i32
    return %c0_i32, %c0_i32_0, %c0_i32_1 : i32, i32, i32
  }
  func.func @transform_3(%arg0: i32) -> (i32, i32) {
    %c0_i32 = arith.constant 0 : i32
    %c0_i32_0 = arith.constant 0 : i32
    %c0_i32_1 = arith.constant 0 : i32
    return %c0_i32, %c0_i32_0 : i32, i32
  }
  func.func @transform_4(%arg0: i32) -> (i32, i32) {
    %c0_i32 = arith.constant 0 : i32
    %c0_i32_0 = arith.constant 0 : i32
    %c0_i32_1 = arith.constant 0 : i32
    return %c0_i32, %c0_i32_0 : i32, i32
  }
  func.func @transform_5(%arg0: i32) -> (i32, i32) {
    %c0_i32 = arith.constant 0 : i32
    %c0_i32_0 = arith.constant 0 : i32
    %c0_i32_1 = arith.constant 0 : i32
    return %c0_i32, %c0_i32_0 : i32, i32
  }
  func.func @transform_6(%arg0: i32) -> (i32, i32) {
    %c0_i32 = arith.constant 0 : i32
    %c0_i32_0 = arith.constant 0 : i32
    return %arg0, %c0_i32 : i32, i32
  }
}

</mosaic_0001>

<llo_original>
// kernel: tpu_custom_call.1
$region0: #{tpu_custom_call.1}
  #allocation0 [shape = 'u32[]', space=smem, size = 0x4, offset = 0x4, fixed_abs, tag = 'smem constant byte address 0x4 - core index']
  #allocation1 [shape = 'u32[72,128]{1,0:T(1,128)}', space=vmem, size = 0x9000, scoped, tag = 'internal scratch']
  #allocation2 [shape = 'f32[1,1]{1,0:T(1,128)S(1)}', space=vmem, size = 0x200, scoped, tag = 'scoped memory for tpu_custom_call.1']
  %s0 = inlined_call_operand.vmem [shape: s32[8,3], index: 0, kind: input, shape index: {}]
  %s1 = inlined_call_operand.vmem [shape: bf16[16,100], index: 1, kind: input, shape index: {}]
  %s2 = inlined_call_operand.vmem [shape: bf16[3,100,33], index: 2, kind: input, shape index: {}]
  %s3 = inlined_call_operand.vmem [shape: f32[1,32], index: 3, kind: input, shape index: {}]
  %s4 = inlined_call_operand.vmem [shape: f32[1,32], index: 4, kind: input, shape index: {}]
  %s5 = inlined_call_operand.<no memory space> [shape: f32[1,1], index: 5, kind: input, shape index: {}]
  %s6 = inlined_call_operand.vmem [shape: f32[8,1], index: 6, kind: output, shape index: {}]
  %s7 = sld [smem:[#allocation0]]
  $region34: #{tpu_custom_call.1} parent=0
    _
  %s9 = ssub.s32 1, %s7
  %s10 = scalar_select 0, %s9, %s7
  %v11 = vstv %s5
  %12 = vst [vmem:[#allocation2] sm:$0x1] %v11
  // Predicated region
  $region2: #{tpu_custom_call.1} parent=0 // pred_check
    _
  $region3: #{tpu_custom_call.1} parent=0 // pred_check_branch
    %14 = sbr.rel (0) target = $region5
  $region4: #{tpu_custom_call.1} parent=0 // pred_region
    _
  $region5: #{tpu_custom_call.1} parent=0 // pred_fallthru
    _
  // Predicated region
  $region6: #{tpu_custom_call.1} parent=0 // pred_check
    _
  $region7: #{tpu_custom_call.1} parent=0 // pred_check_branch
    %16 = sbr.rel (0) target = $region9
  $region8: #{tpu_custom_call.1} parent=0 // pred_region
    _
  $region9: #{tpu_custom_call.1} parent=0 // pred_fallthru
    _
  // Predicated region
  $region10: #{tpu_custom_call.1} parent=0 // pred_check
    _
  $region11: #{tpu_custom_call.1} parent=0 // pred_check_branch
    %18 = sbr.rel (0) target = $region13
  $region12: #{tpu_custom_call.1} parent=0 // pred_region
    _
  $region13: #{tpu_custom_call.1} parent=0 // pred_fallthru
    _
  // Predicated region
  $region14: #{tpu_custom_call.1} parent=0 // pred_check
    _
  $region15: #{tpu_custom_call.1} parent=0 // pred_check_branch
    %20 = sbr.rel (0) target = $region17
  $region16: #{tpu_custom_call.1} parent=0 // pred_region
    _
  $region17: #{tpu_custom_call.1} parent=0 // pred_fallthru
    _
  // Predicated region
  $region18: #{tpu_custom_call.1} parent=0 // pred_check
    _
  $region19: #{tpu_custom_call.1} parent=0 // pred_check_branch
    %22 = sbr.rel (0) target = $region21
  $region20: #{tpu_custom_call.1} parent=0 // pred_region
    _
  $region21: #{tpu_custom_call.1} parent=0 // pred_fallthru
    _
  // Predicated region
  $region22: #{tpu_custom_call.1} parent=0 // pred_check
    _
  $region23: #{tpu_custom_call.1} parent=0 // pred_check_branch
    %24 = sbr.rel (0) target = $region25
  $region24: #{tpu_custom_call.1} parent=0 // pred_region
    _
  $region25: #{tpu_custom_call.1} parent=0 // pred_fallthru
    _
  %v26 = vld [vmem:[%s0] sm:$0xff]
  %v27 = vld [vmem:[%s1] sm:$0xf]
  %v28 = vld [vmem:[%s1 + $0x4] sm:$0xf]
  %v29 = vlaneseq
  %v30 = vand.u32 %v29, 127
  %31 = vset.pattern.permute.xlu0 0
  %32 = vperm.xlu0 %31, %v26
  %v33 = vpop.permute.xlu0 %32
  %vm34 = vcmp.eq.s32.totalorder %v33, %v30
  %v35 = vsel %vm34, 1, 0
  %v36 = vcvt.s32.f32 %v35
  %v37 = vpack.c.bf16 %v36, %v36
  %v40 = vunpack.c.l.b16 %v27
  %v41 = vunpack.c.l.b16 %v28
  %v42 = vpack.c.b16 %v41, %v40
  %vm44 = vcmask 130048
  %v46 = vsel %vm44, %v37, 0
  %48 = vmatpush.bf16.msra.mxu0 0
  %49 = vmatpush.bf16.msra.mxu0 0
  %50 = vmatpush.bf16.msra.mxu0 0
  %51 = vmatpush.bf16.msra.mxu0 0
  %52 = vmatpush.bf16.msra.mxu0 0
  %53 = vmatpush.bf16.msra.mxu0 0
  %54 = vmatpush.bf16.msra.mxu0 0
  %55 = vmatpush.bf16.msra.mxu0 %v42
  %56 = vmatmul.bf16.gmra.mxu0 %v46
  %v57 = vpop.f32.mrf.mxu0
  %v58 = vadd.f32 0.0, %v57
  %v59 = vpop.f32.mrf.mxu0
  %60 = vdwg.mxu0
  %v61 = vpack.c.bf16 %v58, %v58
  %v62 = vld [vmem:[%s2] sm:$0xf]
  %v63 = vld [vmem:[%s2 + $0x4] sm:$0xf]
  %v64 = vld [vmem:[%s2 + $0x8] sm:$0xf]
  %v65 = vld [vmem:[%s2 + $0xc] sm:$0xf]
  %v66 = vld [vmem:[%s2 + $0x10] sm:$0xf]
  %v67 = vld [vmem:[%s2 + $0x14] sm:$0xf]
  %v68 = vld [vmem:[%s2 + $0x18] sm:$0xf]
  %v69 = vld [vmem:[%s2 + $0x1c] sm:$0xf]
  %v70 = vld [vmem:[%s2 + $0x20] sm:$0xf]
  %v71 = vld [vmem:[%s2 + $0x24] sm:$0xf]
  %v72 = vld [vmem:[%s2 + $0x28] sm:$0xf]
  %v73 = vld [vmem:[%s2 + $0x2c] sm:$0xf]
  %v74 = vld [vmem:[%s2 + $0x30] sm:$0x3]
  %75 = vset.pattern.permute.xlu0 1
  %76 = vperm.xlu0 %75, %v26
  %v77 = vpop.permute.xlu0 %76
  %vm78 = vcmp.eq.s32.totalorder %v77, %v30
  %v79 = vsel %vm78, 1, 0
  %v80 = vcvt.s32.f32 %v79
  %v81 = vpack.c.bf16 %v80, %v80
  %v83 = vsel %vm44, %v81, 0
  %85 = vmatpush.bf16.msra.mxu0 0
  %86 = vmatpush.bf16.msra.mxu0 0
  %87 = vmatpush.bf16.msra.mxu0 0
  %88 = vmatpush.bf16.msra.mxu0 0
  %89 = vmatpush.bf16.msra.mxu0 0
  %90 = vmatpush.bf16.msra.mxu0 0
  %91 = vmatpush.bf16.msra.mxu0 0
  %92 = vmatpush.bf16.msra.mxu0 %v42
  %93 = vmatmul.bf16.gmra.mxu0 %v83
  %v94 = vpop.f32.mrf.mxu0
  %v95 = vadd.f32 0.0, %v94
  %v96 = vpop.f32.mrf.mxu0
  %97 = vdwg.mxu0
  %v98 = vpack.c.bf16 %v95, %v95
  %s99 = scalar_lea.vmem %s2, 52
  %v100 = vld [vmem:[%s99] sm:$0xf]
  %v101 = vld [vmem:[%s99 + $0x4] sm:$0xf]
  %v102 = vld [vmem:[%s99 + $0x8] sm:$0xf]
  %v103 = vld [vmem:[%s99 + $0xc] sm:$0xf]
  %v104 = vld [vmem:[%s99 + $0x10] sm:$0xf]
  %v105 = vld [vmem:[%s99 + $0x14] sm:$0xf]
  %v106 = vld [vmem:[%s99 + $0x18] sm:$0xf]
  %v107 = vld [vmem:[%s99 + $0x1c] sm:$0xf]
  %v108 = vld [vmem:[%s99 + $0x20] sm:$0xf]
  %v109 = vld [vmem:[%s99 + $0x24] sm:$0xf]
  %v110 = vld [vmem:[%s99 + $0x28] sm:$0xf]
  %v111 = vld [vmem:[%s99 + $0x2c] sm:$0xf]
  %v112 = vld [vmem:[%s99 + $0x30] sm:$0x3]
  %v126 = vunpack.c.l.b16 %v100
  %v127 = vunpack.c.l.b16 %v101
  %v128 = vunpack.c.l.b16 %v102
  %v129 = vunpack.c.l.b16 %v103
  %v130 = vunpack.c.l.b16 %v104
  %v131 = vunpack.c.l.b16 %v105
  %v132 = vunpack.c.l.b16 %v106
  %v133 = vunpack.c.l.b16 %v107
  %v134 = vunpack.c.l.b16 %v108
  %v135 = vunpack.c.l.b16 %v109
  %v136 = vunpack.c.l.b16 %v110
  %v137 = vunpack.c.l.b16 %v111
  %v138 = vunpack.c.l.b16 %v112
  %v139 = vpack.c.b16 %v127, %v126
  %v140 = vpack.c.b16 %v129, %v128
  %v141 = vpack.c.b16 %v131, %v130
  %v142 = vpack.c.b16 %v133, %v132
  %v143 = vpack.c.b16 %v135, %v134
  %v144 = vpack.c.b16 %v137, %v136
  %v145 = vpack.c.b16 %v138, %v138
  %vm152 = vcmask 818176
  %v154 = vsel %vm152, %v98, 0
  %vm156 = vcmask 1041408
  %v158 = vsel %vm156, %v145, 0
  %160 = vmatpush.bf16.msra.mxu0 0
  %161 = vmatpush.bf16.msra.mxu0 %v158
  %162 = vmatpush.bf16.msra.mxu0 %v144
  %163 = vmatpush.bf16.msra.mxu0 %v143
  %164 = vmatpush.bf16.msra.mxu0 %v142
  %165 = vmatpush.bf16.msra.mxu0 %v141
  %166 = vmatpush.bf16.msra.mxu0 %v140
  %167 = vmatpush.bf16.msra.mxu0 %v139
  %168 = vmatmul.bf16.gmra.mxu0 %v154
  %v169 = vpop.f32.mrf.mxu0
  %v170 = vadd.f32 0.0, %v169
  %v171 = vpop.f32.mrf.mxu0
  %172 = vdwg.mxu0
  %v186 = vunpack.c.l.b16 %v62
  %v187 = vunpack.c.l.b16 %v63
  %v188 = vunpack.c.l.b16 %v64
  %v189 = vunpack.c.l.b16 %v65
  %v190 = vunpack.c.l.b16 %v66
  %v191 = vunpack.c.l.b16 %v67
  %v192 = vunpack.c.l.b16 %v68
  %v193 = vunpack.c.l.b16 %v69
  %v194 = vunpack.c.l.b16 %v70
  %v195 = vunpack.c.l.b16 %v71
  %v196 = vunpack.c.l.b16 %v72
  %v197 = vunpack.c.l.b16 %v73
  %v198 = vunpack.c.l.b16 %v74
  %v199 = vpack.c.b16 %v187, %v186
  %v200 = vpack.c.b16 %v189, %v188
  %v201 = vpack.c.b16 %v191, %v190
  %v202 = vpack.c.b16 %v193, %v192
  %v203 = vpack.c.b16 %v195, %v194
  %v204 = vpack.c.b16 %v197, %v196
  %v205 = vpack.c.b16 %v198, %v198
  %v213 = vsel %vm152, %v61, 0
  %v216 = vsel %vm156, %v205, 0
  %218 = vmatpush.bf16.msra.mxu0 0
  %219 = vmatpush.bf16.msra.mxu0 %v216
  %220 = vmatpush.bf16.msra.mxu0 %v204
  %221 = vmatpush.bf16.msra.mxu0 %v203
  %222 = vmatpush.bf16.msra.mxu0 %v202
  %223 = vmatpush.bf16.msra.mxu0 %v201
  %224 = vmatpush.bf16.msra.mxu0 %v200
  %225 = vmatpush.bf16.msra.mxu0 %v199
  %226 = vmatmul.bf16.gmra.mxu0 %v213
  %v227 = vpop.f32.mrf.mxu0
  %v228 = vadd.f32 %v170, %v227
  %v229 = vpop.f32.mrf.mxu0
  %230 = vdwg.mxu0
  %231 = vset.pattern.permute.xlu0 2
  %232 = vperm.xlu0 %231, %v26
  %v233 = vpop.permute.xlu0 %232
  %vm234 = vcmp.eq.s32.totalorder %v233, %v30
  %v235 = vsel %vm234, 1, 0
  %v236 = vcvt.s32.f32 %v235
  %v237 = vpack.c.bf16 %v236, %v236
  %v239 = vsel %vm44, %v237, 0
  %241 = vmatpush.bf16.msra.mxu0 0
  %242 = vmatpush.bf16.msra.mxu0 0
  %243 = vmatpush.bf16.msra.mxu0 0
  %244 = vmatpush.bf16.msra.mxu0 0
  %245 = vmatpush.bf16.msra.mxu0 0
  %246 = vmatpush.bf16.msra.mxu0 0
  %247 = vmatpush.bf16.msra.mxu0 0
  %248 = vmatpush.bf16.msra.mxu0 %v42
  %249 = vmatmul.bf16.gmra.mxu0 %v239
  %v250 = vpop.f32.mrf.mxu0
  %v251 = vadd.f32 0.0, %v250
  %v252 = vpop.f32.mrf.mxu0
  %253 = vdwg.mxu0
  %v254 = vpack.c.bf16 %v251, %v251
  %s255 = scalar_lea.vmem %s2, 104
  %v256 = vld [vmem:[%s255] sm:$0xf]
  %v257 = vld [vmem:[%s255 + $0x4] sm:$0xf]
  %v258 = vld [vmem:[%s255 + $0x8] sm:$0xf]
  %v259 = vld [vmem:[%s255 + $0xc] sm:$0xf]
  %v260 = vld [vmem:[%s255 + $0x10] sm:$0xf]
  %v261 = vld [vmem:[%s255 + $0x14] sm:$0xf]
  %v262 = vld [vmem:[%s255 + $0x18] sm:$0xf]
  %v263 = vld [vmem:[%s255 + $0x1c] sm:$0xf]
  %v264 = vld [vmem:[%s255 + $0x20] sm:$0xf]
  %v265 = vld [vmem:[%s255 + $0x24] sm:$0xf]
  %v266 = vld [vmem:[%s255 + $0x28] sm:$0xf]
  %v267 = vld [vmem:[%s255 + $0x2c] sm:$0xf]
  %v268 = vld [vmem:[%s255 + $0x30] sm:$0x3]
  %v282 = vunpack.c.l.b16 %v256
  %v283 = vunpack.c.l.b16 %v257
  %v284 = vunpack.c.l.b16 %v258
  %v285 = vunpack.c.l.b16 %v259
  %v286 = vunpack.c.l.b16 %v260
  %v287 = vunpack.c.l.b16 %v261
  %v288 = vunpack.c.l.b16 %v262
  %v289 = vunpack.c.l.b16 %v263
  %v290 = vunpack.c.l.b16 %v264
  %v291 = vunpack.c.l.b16 %v265
  %v292 = vunpack.c.l.b16 %v266
  %v293 = vunpack.c.l.b16 %v267
  %v294 = vunpack.c.l.b16 %v268
  %v295 = vpack.c.b16 %v283, %v282
  %v296 = vpack.c.b16 %v285, %v284
  %v297 = vpack.c.b16 %v287, %v286
  %v298 = vpack.c.b16 %v289, %v288
  %v299 = vpack.c.b16 %v291, %v290
  %v300 = vpack.c.b16 %v293, %v292
  %v301 = vpack.c.b16 %v294, %v294
  %v309 = vsel %vm152, %v254, 0
  %v312 = vsel %vm156, %v301, 0
  %314 = vmatpush.bf16.msra.mxu0 0
  %315 = vmatpush.bf16.msra.mxu0 %v312
  %316 = vmatpush.bf16.msra.mxu0 %v300
  %317 = vmatpush.bf16.msra.mxu0 %v299
  %318 = vmatpush.bf16.msra.mxu0 %v298
  %319 = vmatpush.bf16.msra.mxu0 %v297
  %320 = vmatpush.bf16.msra.mxu0 %v296
  %321 = vmatpush.bf16.msra.mxu0 %v295
  %322 = vmatmul.bf16.gmra.mxu0 %v309
  %v323 = vpop.f32.mrf.mxu0
  %v324 = vadd.f32 0.0, %v323
  %v325 = vpop.f32.mrf.mxu0
  %326 = vdwg.mxu0
  %v327 = vadd.f32 %v228, %v324
  %v328 = vld [vmem:[%s3] sm:$0x1]
  %v330 = vperm.slane %v328, 0
  %v332 = vadd.f32 %v330, %v327
  %v333 = vtanh.pop %v332
  %v334 = vld [vmem:[%s4] sm:$0x1]
  %v336 = vperm.slane %v334, 0
  %v338 = vmul.f32 %v333, %v336
  %vm339 = vcmask 261120
  %v340 = vsel %vm339, %v338, 0.0
  %341 = vadd.xlane.f32.xlu0 %v340
  %v342 = vpop.xlane.xlu0 %341
  %v343 = vld [vmem:[#allocation2] sm:$0x1]
  %v345 = vperm.slane %v343, 0
  %348 = vrot.lane.b32.xlu0 %v327, 96
  %v349 = vpop.permute.xlu0 %348
  %v351 = vadd.f32 %v345, %v349
  %v352 = vadd.f32 %v351, %v342
  %vm353 = vcmask 7168
  %354 = vst.msk [vmem:[%s6] sm:$0xff] %vm353, %v352
  // Predicated region
  $region26: #{tpu_custom_call.1} parent=0 // pred_check
    _
  $region27: #{tpu_custom_call.1} parent=0 // pred_check_branch
    %356 = sbr.rel (0) target = $region29
  $region28: #{tpu_custom_call.1} parent=0 // pred_region
    _
  $region29: #{tpu_custom_call.1} parent=0 // pred_fallthru
    _
  // Predicated region
  $region30: #{tpu_custom_call.1} parent=0 // pred_check
    _
  $region31: #{tpu_custom_call.1} parent=0 // pred_check_branch
    %358 = sbr.rel (0) target = $region33
  $region32: #{tpu_custom_call.1} parent=0 // pred_region
    _
  $region33: #{tpu_custom_call.1} parent=0 // pred_fallthru
    _

</llo_original>
